<compile_context>
chip_gen: v7x
topology: tpu7x:2x2x1
jax: 0.10.0
libtpu: 0.0.40
codegen_flags: <defaults>
</compile_context>

<pallas_src>
import jax
import jax.numpy as jnp
from jax.experimental import pallas as pl
from jax.experimental.pallas import tpu as pltpu


def _linear_sigmoid_kernel(x_ref, wt_ref, b_ref, o_ref):
    # x_ref : (TB, D)   wt_ref : (D, Tp)   b_ref : (1, Tp)   o_ref : (TB, Tp)
    x = x_ref[...]
    wt = wt_ref[...]
    b = b_ref[...]
    # Only upcast when needed (no-op casts removed for the f32 path; keep the
    # f32 compute path for bf16 inputs — required on v5e, cheap elsewhere).
    if x.dtype != jnp.float32:
        x = x.astype(jnp.float32)
    if wt.dtype != jnp.float32:
        wt = wt.astype(jnp.float32)
    if b.dtype != jnp.float32:
        b = b.astype(jnp.float32)

    # Tiny contraction (D == 5): unrolled VPU broadcast-FMA instead of pushing
    # a 5x3 problem through the MXU systolic array.
    n_dims = x.shape[1]
    y = b  # (1, Tp) -> broadcasts to (TB, Tp) on first add
    for d in range(n_dims):
        y = y + x[:, d : d + 1] * wt[d : d + 1, :]

    o_ref[...] = jax.nn.sigmoid(y).astype(o_ref.dtype)


def neuron_named_dict_forward(params, input_x=None, input_y=None, *, batch_tile=512):
    """Mirrors NeuronNamedDict.forward: prefers input_x, falls back to input_y."""
    x = input_y if input_x is None else input_x
    wt, b = params["weight_t"], params["bias"]  # (D, T), (1, T)
    batch, n_dims = x.shape
    n_targets = wt.shape[1]

    # Lane-dense output: pad the target dim up to a multiple of 128 with zero
    # weight/bias columns (sigmoid(0)=0.5 in the pad region, sliced off below).
    t_pad = 128 * pl.cdiv(n_targets, 128)
    wt_p = jnp.pad(wt, ((0, 0), (0, t_pad - n_targets)))
    b_p = jnp.pad(b, ((0, 0), (0, t_pad - n_targets)))

    if batch <= batch_tile:
        # Small/native case: no grid, whole arrays resident in VMEM.
        out = pl.pallas_call(
            _linear_sigmoid_kernel,
            out_shape=jax.ShapeDtypeStruct((batch, t_pad), x.dtype),
            in_specs=[
                pl.BlockSpec(memory_space=pltpu.MemorySpace.VMEM),
                pl.BlockSpec(memory_space=pltpu.MemorySpace.VMEM),
                pl.BlockSpec(memory_space=pltpu.MemorySpace.VMEM),
            ],
            out_specs=pl.BlockSpec(memory_space=pltpu.MemorySpace.VMEM),
        )(x, wt_p, b_p)
        return out[:, :n_targets]

    # Large-batch path: tile the batch axis (multiple of 8), stream it through
    # VMEM double-buffering, weight/bias pinned to block (0,0), grid marked
    # "parallel" so v7x can shard it across its two TensorCores.
    tb = batch_tile
    n_blocks = pl.cdiv(batch, tb)
    batch_padded = n_blocks * tb
    x_p = jnp.pad(x, ((0, batch_padded - batch), (0, 0))) if batch_padded != batch else x

    out = pl.pallas_call(
        _linear_sigmoid_kernel,
        out_shape=jax.ShapeDtypeStruct((batch_padded, t_pad), x.dtype),
        grid=(n_blocks,),
        in_specs=[
            pl.BlockSpec((tb, n_dims), lambda i: (i, 0)),
            pl.BlockSpec((n_dims, t_pad), lambda i: (0, 0)),
            pl.BlockSpec((1, t_pad), lambda i: (0, 0)),
        ],
        out_specs=pl.BlockSpec((tb, t_pad), lambda i: (i, 0)),
        compiler_params=pltpu.CompilerParams(dimension_semantics=("parallel",)),
    )(x_p, wt_p, b_p)
    return out[:batch, :n_targets]


def init_params(key, n_dims=5, n_targets=3, dtype=jnp.float32):
    """Deterministic init matching torch.nn.Linear(n_dims, n_targets) shapes."""
    kw, kb = jax.random.split(key)
    bound = 1.0 / (n_dims ** 0.5)
    # torch Linear.weight has shape (n_targets, n_dims); we keep it transposed.
    w = jax.random.uniform(kw, (n_targets, n_dims), dtype, minval=-bound, maxval=bound)
    b = jax.random.uniform(kb, (1, n_targets), dtype, minval=-bound, maxval=bound)
    return {"weight_t": w.T, "bias": b}


if __name__ == "__main__":
    key = jax.random.PRNGKey(0)
    k_params, k_in, k_big = jax.random.split(key, 3)

    n_dims, n_targets = 5, 3
    params = init_params(k_params, n_dims=n_dims, n_targets=n_targets)

    def ref_fn(x):
        return jax.nn.sigmoid(x @ params["weight_t"] + params["bias"])

    # Module's _get_random_inputs uses {'input_y': randn(1, 5)} -> no-grid path.
    input_y = jax.random.normal(k_in, (1, n_dims), dtype=jnp.float32)
    out = neuron_named_dict_forward(params, input_x=None, input_y=input_y)
    out = jax.block_until_ready(out)
    assert out.shape == (1, n_targets)
    assert jnp.allclose(out, ref_fn(input_y), atol=1e-5), "mismatch vs reference (batch=1)"

    # Exercise the batch-tiled path (non-multiple of the tile to test padding).
    x_big = jax.random.normal(k_big, (1000, n_dims), dtype=jnp.float32)
    out_big = neuron_named_dict_forward(params, input_x=x_big)
    out_big = jax.block_until_ready(out_big)
    assert out_big.shape == (1000, n_targets)
    assert jnp.allclose(out_big, ref_fn(x_big), atol=1e-5), "mismatch vs reference (batch=1000)"

    print("KERNEL_OK")
</pallas_src>

<mosaic_0001>
module attributes {stable_mosaic.version = 11 : i64} {
  func.func @_linear_sigmoid_kernel(%arg0: memref<1x5xf32, #tpu.memory_space<vmem>>, %arg1: memref<5x128xf32, #tpu.memory_space<vmem>>, %arg2: memref<1x128xf32, #tpu.memory_space<vmem>>, %arg3: memref<1x128xf32, #tpu.memory_space<vmem>>) attributes {dimension_semantics = [], scalar_prefetch = 0 : i64, scratch_operands = 0 : i64, tpu.core_type = #tpu.core_type<tc>} {
    %c0 = arith.constant 0 : index
    %c0_0 = arith.constant 0 : index
    %0 = vector.load %arg0[%c0, %c0_0] : memref<1x5xf32, #tpu.memory_space<vmem>>, vector<1x5xf32>
    %c0_1 = arith.constant 0 : index
    %c0_2 = arith.constant 0 : index
    %1 = vector.load %arg1[%c0_1, %c0_2] : memref<5x128xf32, #tpu.memory_space<vmem>>, vector<5x128xf32>
    %c0_3 = arith.constant 0 : index
    %c0_4 = arith.constant 0 : index
    %2 = vector.load %arg2[%c0_3, %c0_4] : memref<1x128xf32, #tpu.memory_space<vmem>>, vector<1x128xf32>
    %3 = vector.extract_strided_slice %0 {offsets = [0, 0], sizes = [1, 1], strides = [1, 1]} : vector<1x5xf32> to vector<1x1xf32>
    %4 = vector.extract_strided_slice %1 {offsets = [0, 0], sizes = [1, 128], strides = [1, 1]} : vector<5x128xf32> to vector<1x128xf32>
    %5 = vector.broadcast %3 : vector<1x1xf32> to vector<1x128xf32>
    %6 = arith.mulf %5, %4 : vector<1x128xf32>
    %7 = arith.addf %2, %6 : vector<1x128xf32>
    %8 = vector.extract_strided_slice %0 {offsets = [0, 1], sizes = [1, 1], strides = [1, 1]} : vector<1x5xf32> to vector<1x1xf32>
    %9 = vector.extract_strided_slice %1 {offsets = [1, 0], sizes = [1, 128], strides = [1, 1]} : vector<5x128xf32> to vector<1x128xf32>
    %10 = vector.broadcast %8 : vector<1x1xf32> to vector<1x128xf32>
    %11 = arith.mulf %10, %9 : vector<1x128xf32>
    %12 = arith.addf %7, %11 : vector<1x128xf32>
    %13 = vector.extract_strided_slice %0 {offsets = [0, 2], sizes = [1, 1], strides = [1, 1]} : vector<1x5xf32> to vector<1x1xf32>
    %14 = vector.extract_strided_slice %1 {offsets = [2, 0], sizes = [1, 128], strides = [1, 1]} : vector<5x128xf32> to vector<1x128xf32>
    %15 = vector.broadcast %13 : vector<1x1xf32> to vector<1x128xf32>
    %16 = arith.mulf %15, %14 : vector<1x128xf32>
    %17 = arith.addf %12, %16 : vector<1x128xf32>
    %18 = vector.extract_strided_slice %0 {offsets = [0, 3], sizes = [1, 1], strides = [1, 1]} : vector<1x5xf32> to vector<1x1xf32>
    %19 = vector.extract_strided_slice %1 {offsets = [3, 0], sizes = [1, 128], strides = [1, 1]} : vector<5x128xf32> to vector<1x128xf32>
    %20 = vector.broadcast %18 : vector<1x1xf32> to vector<1x128xf32>
    %21 = arith.mulf %20, %19 : vector<1x128xf32>
    %22 = arith.addf %17, %21 : vector<1x128xf32>
    %23 = vector.extract_strided_slice %0 {offsets = [0, 4], sizes = [1, 1], strides = [1, 1]} : vector<1x5xf32> to vector<1x1xf32>
    %24 = vector.extract_strided_slice %1 {offsets = [4, 0], sizes = [1, 128], strides = [1, 1]} : vector<5x128xf32> to vector<1x128xf32>
    %25 = vector.broadcast %23 : vector<1x1xf32> to vector<1x128xf32>
    %26 = arith.mulf %25, %24 : vector<1x128xf32>
    %27 = arith.addf %22, %26 : vector<1x128xf32>
    %28 = arith.negf %27 : vector<1x128xf32>
    %29 = math.exp %28 : vector<1x128xf32>
    %cst = arith.constant 1.000000e+00 : f32
    %30 = vector.broadcast %cst : f32 to vector<1x128xf32>
    %31 = arith.addf %30, %29 : vector<1x128xf32>
    %32 = arith.divf %30, %31 : vector<1x128xf32>
    %c0_5 = arith.constant 0 : index
    %c0_6 = arith.constant 0 : index
    %33 = vector.load %arg3[%c0_5, %c0_6] : memref<1x128xf32, #tpu.memory_space<vmem>>, vector<1x128xf32>
    tpu.vector_store %arg3[%c0_5, %c0_6], %32 {strides = array<i32>} : memref<1x128xf32, #tpu.memory_space<vmem>>, vector<1x128xf32>,
    return
  }
}

</mosaic_0001>

<llo_original>
// kernel: tpu_custom_call.1
$region0: #{tpu_custom_call.1}
  #allocation0 [shape = 'u32[]', space=smem, size = 0x4, offset = 0x4, fixed_abs, tag = 'smem constant byte address 0x4 - core index']
  #allocation1 [shape = 'u32[144,128]{1,0:T(1,128)}', space=vmem, size = 0x12000, scoped, tag = 'internal scratch']
  %s0 = inlined_call_operand.hbm [shape: f32[1,5], index: 0, kind: input, shape index: {}]
  %s1 = inlined_call_operand.hbm [shape: f32[5,128], index: 1, kind: input, shape index: {}]
  %s2 = inlined_call_operand.vmem [shape: f32[1,128], index: 2, kind: input, shape index: {}]
  %s3 = inlined_call_operand.hbm [shape: f32[1,128], index: 3, kind: output, shape index: {}]
  %s4 = sld [smem:[#allocation0]]
  $region30: #{tpu_custom_call.1} parent=0
    _
  %s6 = ssub.s32 1, %s4
  %s7 = scalar_select 0, %s6, %s4
  $region1: #{tpu_custom_call.1} parent=0
    #allocation2 [shape = 'u8[512]{0}', space=vmem, size = 0x400, scoped, tag = 'input window, operand 0, single buffered']
    #allocation3 [shape = 's32[1]{0}', space=sflag, size = 0x4, scoped, tag = 'scoped memory for tpu_custom_call.1']
    #allocation4 [shape = 's32[1]{0}', space=sflag, size = 0x4, scoped, tag = 'scoped memory for tpu_custom_call.1']
    #allocation5 [shape = 'u8[4096]{0}', space=vmem, size = 0x1000, scoped, tag = 'input window, operand 1, single buffered']
    #allocation6 [shape = 's32[1]{0}', space=sflag, size = 0x4, scoped, tag = 'scoped memory for tpu_custom_call.1']
    #allocation7 [shape = 'u8[512]{0}', space=vmem, size = 0x400, scoped, tag = 'output window, operand 0, single buffered']
    %8 = vsyncpa [#allocation3], 0
    %9 = vsyncpa [#allocation6], 0
    %10 = vsyncpa [#allocation4], 0
    // Predicated region
    $region2: #{tpu_custom_call.1} parent=1 // pred_check
      _
    $region3: #{tpu_custom_call.1} parent=1 // pred_check_branch
      %12 = sbr.rel (0) target = $region5
    $region4: #{tpu_custom_call.1} parent=1 // pred_region
      %s14 = ssub.s32 16, 16
      %15 = vsyncadd [#allocation3], %s14
      %s17 = sshll.u32 [#allocation2], 4
      %s18 = int_to_ptr.vmem [resolvable:$true] %s17
      %20 = dma.hbm_to_vmem [thread:$0]  %s0, 16, %s18, [#allocation3]
    $region5: #{tpu_custom_call.1} parent=1 // pred_fallthru
      _
    // Predicated region
    $region6: #{tpu_custom_call.1} parent=1 // pred_check
      _
    $region7: #{tpu_custom_call.1} parent=1 // pred_check_branch
      %22 = sbr.rel (0) target = $region9
    $region8: #{tpu_custom_call.1} parent=1 // pred_region
      %s24 = ssub.s32 128, 128
      %25 = vsyncadd [#allocation6], %s24
      %s27 = sshll.u32 [#allocation5], 4
      %s28 = int_to_ptr.vmem [resolvable:$true] %s27
      %30 = dma.hbm_to_vmem [thread:$0]  %s1, 128, %s28, [#allocation6]
    $region9: #{tpu_custom_call.1} parent=1 // pred_fallthru
      _
    // Predicated region
    $region10: #{tpu_custom_call.1} parent=1 // pred_check
      _
    $region11: #{tpu_custom_call.1} parent=1 // pred_check_branch
      %32 = sbr.rel (0) target = $region13
    $region12: #{tpu_custom_call.1} parent=1 // pred_region
      _
    $region13: #{tpu_custom_call.1} parent=1 // pred_fallthru
      _
    // Predicated region
    $region14: #{tpu_custom_call.1} parent=1 // pred_check
      _
    $region15: #{tpu_custom_call.1} parent=1 // pred_check_branch
      %34 = sbr.rel (0) target = $region17
    $region16: #{tpu_custom_call.1} parent=1 // pred_region
      %35 = dma.done [#allocation3], 16
    $region17: #{tpu_custom_call.1} parent=1 // pred_fallthru
      _
    // Predicated region
    $region18: #{tpu_custom_call.1} parent=1 // pred_check
      _
    $region19: #{tpu_custom_call.1} parent=1 // pred_check_branch
      %37 = sbr.rel (0) target = $region21
    $region20: #{tpu_custom_call.1} parent=1 // pred_region
      %38 = dma.done [#allocation6], 128
    $region21: #{tpu_custom_call.1} parent=1 // pred_fallthru
      _
    %v39 = vld [vmem:[#allocation2] sm:$0x1]
    %v40 = vld [vmem:[#allocation5] sm:$0x1f]
    %v41 = vld [vmem:[%s2] sm:$0x1]
    %43 = vset.pattern.permute.xlu0 0
    %44 = vperm.xlu0 %43, %v39
    %v45 = vpop.permute.xlu0 %44
    %v47 = vlaneseq
    %v48 = vshrl.u32 %v47, 7
    %v49 = vsub.s32 0, %v48
    %v50 = vrot.slane %v45, %v49
    %v51 = vmul.f32 %v50, %v40
    %v52 = vadd.f32 %v41, %v51
    %53 = vset.pattern.permute.xlu0 1
    %54 = vperm.xlu0 %53, %v39
    %v55 = vpop.permute.xlu0 %54
    %v57 = vlaneseq
    %v58 = vshrl.u32 %v57, 7
    %v59 = vsub.s32 0, %v58
    %v60 = vrot.slane %v55, %v59
    %v61 = vmul.f32 %v60, %v40
    %v64 = vunpack.c.l.s4 1966171168
    %v65 = vunpack.c.0.s8 %v64
    %v66 = vlaneseq
    %v67 = vshrl.u32 %v66, 7
    %v68 = vsub.s32 %v65, %v67
    %v69 = vrot.slane %v61, %v68
    %v70 = vcombine.high %v69, %v69
    %v72 = vunpack.c.l.s4 1966171168
    %v73 = vunpack.c.0.s8 %v72
    %v74 = vlaneseq
    %v75 = vshrl.u32 %v74, 7
    %v76 = vsub.s32 %v73, %v75
    %v77 = vrot.slane %v70, %v76
    %v79 = vadd.f32 %v52, %v77
    %80 = vset.pattern.permute.xlu0 2
    %81 = vperm.xlu0 %80, %v39
    %v82 = vpop.permute.xlu0 %81
    %v84 = vlaneseq
    %v85 = vshrl.u32 %v84, 7
    %v86 = vsub.s32 0, %v85
    %v87 = vrot.slane %v82, %v86
    %v88 = vmul.f32 %v87, %v40
    %v91 = vunpack.c.l.s4 1966171168
    %v92 = vunpack.c.0.s8 %v91
    %v93 = vlaneseq
    %v94 = vshrl.u32 %v93, 7
    %v95 = vsub.s32 %v92, %v94
    %v96 = vrot.slane %v88, %v95
    %v98 = vunpack.c.l.s4 1966171168
    %v99 = vunpack.c.0.s8 %v98
    %v100 = vlaneseq
    %v101 = vshrl.u32 %v100, 7
    %v102 = vsub.s32 %v99, %v101
    %v103 = vrot.slane %v96, %v102
    %v104 = vcombine.high %v103, %v103
    %v106 = vadd.f32 %v79, %v104
    %107 = vset.pattern.permute.xlu0 3
    %108 = vperm.xlu0 %107, %v39
    %v109 = vpop.permute.xlu0 %108
    %v111 = vlaneseq
    %v112 = vshrl.u32 %v111, 7
    %v113 = vsub.s32 0, %v112
    %v114 = vrot.slane %v109, %v113
    %v115 = vmul.f32 %v114, %v40
    %v118 = vunpack.c.l.s4 1966171168
    %v119 = vunpack.c.0.s8 %v118
    %v120 = vlaneseq
    %v121 = vshrl.u32 %v120, 7
    %v122 = vsub.s32 %v119, %v121
    %v123 = vrot.slane %v115, %v122
    %v124 = vcombine.high %v123, %v123
    %v126 = vunpack.c.l.s4 1966171168
    %v127 = vunpack.c.0.s8 %v126
    %v128 = vlaneseq
    %v129 = vshrl.u32 %v128, 7
    %v130 = vsub.s32 %v127, %v129
    %v131 = vrot.slane %v124, %v130
    %v132 = vcombine.high %v131, %v131
    %v134 = vadd.f32 %v106, %v132
    %135 = vset.pattern.permute.xlu0 4
    %136 = vperm.xlu0 %135, %v39
    %v137 = vpop.permute.xlu0 %136
    %v139 = vlaneseq
    %v140 = vshrl.u32 %v139, 7
    %v141 = vsub.s32 0, %v140
    %v142 = vrot.slane %v137, %v141
    %v143 = vmul.f32 %v142, %v40
    %v145 = vcombine.high %v143, %v143
    %v147 = vunpack.c.l.s4 1966171168
    %v148 = vunpack.c.0.s8 %v147
    %v149 = vlaneseq
    %v150 = vshrl.u32 %v149, 7
    %v151 = vsub.s32 %v148, %v150
    %v152 = vrot.slane %v145, %v151
    %v154 = vunpack.c.l.s4 1966171168
    %v155 = vunpack.c.0.s8 %v154
    %v156 = vlaneseq
    %v157 = vshrl.u32 %v156, 7
    %v158 = vsub.s32 %v155, %v157
    %v159 = vrot.slane %v152, %v158
    %v161 = vadd.f32 %v134, %v159
    %v162 = vxor.u32 %v161, 2147483648
    %v163 = vmul.f32 %v162, 1.442695
    %v164 = vpow.pop %v163
    %v165 = vadd.f32 %v164, 1.0
    %v166 = vrcp.pop %v165
    %v167 = vmul.f32 1.0, %v166
    %168 = vst [vmem:[#allocation7] sm:$0x1] %v167
    // Predicated region
    $region22: #{tpu_custom_call.1} parent=1 // pred_check
      _
    $region23: #{tpu_custom_call.1} parent=1 // pred_check_branch
      %170 = sbr.rel (0) target = $region25
    $region24: #{tpu_custom_call.1} parent=1 // pred_region
      %s172 = ssub.s32 16, 16
      %173 = vsyncadd [#allocation4], %s172
      %s175 = sshll.u32 [#allocation7], 4
      %s176 = int_to_ptr.vmem [resolvable:$true] %s175
      %178 = dma.vmem_to_hbm [thread:$0]  %s176, 16, %s3, [#allocation4]
    $region25: #{tpu_custom_call.1} parent=1 // pred_fallthru
      _
    // Predicated region
    $region26: #{tpu_custom_call.1} parent=1 // pred_check
      _
    $region27: #{tpu_custom_call.1} parent=1 // pred_check_branch
      %180 = sbr.rel (0) target = $region29
    $region28: #{tpu_custom_call.1} parent=1 // pred_region
      %181 = dma.done [#allocation4], 16
    $region29: #{tpu_custom_call.1} parent=1 // pred_fallthru
      _
    %182 = vsyncpa [#allocation3], 1
    %183 = vsyncpa [#allocation6], 1
    %184 = vsyncpa [#allocation4], 1

</llo_original>
